<compile_context>
chip_gen: v5e
topology: v5e:2x2
jax: 0.10.0
libtpu: 0.0.40
codegen_flags: <defaults>
</compile_context>

<pallas_src>
import functools

import jax
import jax.numpy as jnp
from jax import lax
from jax.experimental import pallas as pl
from jax.experimental.pallas import tpu as pltpu


# --------------------------------------------------------------------------
# Pallas kernel.
# --------------------------------------------------------------------------
def _char_conv_kernel(ids_ref, g_ref, w2_ref, b1_ref, b2_ref, out_ref,
                      h_ref, z_ref):
    # ids_ref: (T, Bt) int32    char ids, time-major, batch on the lane axis
    # g_ref  : (3, V, C) f32    per-tap emb @ W1[k]  (embedding folded in)
    # w2_ref : (3, C, C) f32    per-tap conv2 weights, (in, out)
    # b1_ref : (1, C) f32       conv1 bias
    # b2_ref : (1, C) f32       conv2 bias
    # out_ref: (Bt, C) f32
    # h_ref  : (T, Bt, C) f32   VMEM scratch: conv1 activations
    # z_ref  : (T, Bt, C) f32   VMEM scratch: conv2 pre-activations
    T, Bt = ids_ref.shape
    V = g_ref.shape[1]
    C = out_ref.shape[1]

    # One-hot "gather" of the folded conv1 tables, built once and fed to the
    # MXU as (T*Bt, V) @ (V, C) matmuls (id 0 selects the zero padding row).
    ids = ids_ref[...]
    iota = lax.broadcasted_iota(jnp.int32, (T, Bt, V), 2)
    oneh = (ids[:, :, None] == iota).astype(jnp.float32)        # (T, Bt, V)

    def big_dot(x3, w2d):
        # (T', Bt, K) @ (K, C) -> (T', Bt, C) as ONE MXU matmul with M = T'*Bt
        # (leading-dim collapse is layout-free: Bt is a multiple of 8).
        tp, _, k = x3.shape
        y = jnp.dot(x3.reshape(tp * Bt, k), w2d,
                    preferred_element_type=jnp.float32)
        return y.reshape(tp, Bt, C)

    # ---- conv1 (k=3, pad=1) + ReLU: 3 full-length matmuls + shifted adds ---
    h_ref[...] = big_dot(oneh, g_ref[1]) + b1_ref[...]          # center tap
    if T > 1:
        # tap 0 uses x[t-1] -> contributes to t in [1, T)
        h_ref[pl.ds(1, T - 1)] = (h_ref[pl.ds(1, T - 1)]
                                  + big_dot(oneh[:T - 1], g_ref[0]))
        # tap 2 uses x[t+1] -> contributes to t in [0, T-1)
        h_ref[pl.ds(0, T - 1)] = (h_ref[pl.ds(0, T - 1)]
                                  + big_dot(oneh[1:], g_ref[2]))
    h_ref[...] = jnp.maximum(h_ref[...], 0.0)

    # ---- conv2 (k=3, pad=1) + ReLU + AdaptiveMaxPool1d(1), fused -----------
    z_ref[...] = big_dot(h_ref[...], w2_ref[1]) + b2_ref[...]
    if T > 1:
        z_ref[pl.ds(1, T - 1)] = (z_ref[pl.ds(1, T - 1)]
                                  + big_dot(h_ref[pl.ds(0, T - 1)], w2_ref[0]))
        z_ref[pl.ds(0, T - 1)] = (z_ref[pl.ds(0, T - 1)]
                                  + big_dot(h_ref[pl.ds(1, T - 1)], w2_ref[2]))
    z = jnp.maximum(z_ref[...], 0.0)
    out_ref[...] = jnp.max(z, axis=0)                           # max over T


# --------------------------------------------------------------------------
# Wrapper: fold embedding into conv1, repack weights, tile the batch.
# --------------------------------------------------------------------------
def _round_up(n, m):
    return (n + m - 1) // m * m


@functools.partial(jax.jit, static_argnames=("out_dim",))
def character_conv_forward(char_ids, params, *, out_dim):
    """char_ids: (B, T) int32, 0-padded (pad_sequence semantics).

    Returns (B, out_dim) f32 == convs(embeddings(ids).transpose(1,2)).squeeze(2).
    """
    B, T = char_ids.shape
    emb = params["emb"].astype(jnp.float32)                     # (V, E)
    V, _ = emb.shape
    C = out_dim

    w1 = params["w1"].astype(jnp.float32)                       # (C, E, 3)
    w2 = params["w2"].astype(jnp.float32)                       # (C, C, 3)
    b1 = params["b1"].reshape(1, C).astype(jnp.float32)
    b2 = params["b2"].reshape(1, C).astype(jnp.float32)

    # Fold the embedding through conv1: G[k] = emb @ W1[k]  -> (3, V, C).
    # padding_idx=0 rows map to G[k][0] = 0, matching the zero-embedding pads.
    G = jnp.einsum("ve,cek->kvc", emb, w1,
                   precision=lax.Precision.HIGHEST)
    # conv2 per-tap weights as (3, C_in, C_out).
    W2 = jnp.transpose(w2, (2, 1, 0))

    # Ids, time-major with batch on the lane (last) axis.
    ids_tm = char_ids.T.astype(jnp.int32)                       # (T, B)

    # Batch tiling: lane-dense 128-multiples and >=2 programs (v7x has two
    # TensorCores) once the batch is big enough; 256-row cap keeps block +
    # scratch far under v7x's 64 MiB VMEM given the 128-lane padding of C=32.
    if B > 128:
        B_tile = 256 if B > 512 else 128
    else:
        B_tile = _round_up(B, 8)
    B_pad = _round_up(B, B_tile)
    if B_pad != B:
        ids_tm = jnp.pad(ids_tm, ((0, 0), (0, B_pad - B)))      # pad ids = 0

    out = pl.pallas_call(
        _char_conv_kernel,
        out_shape=jax.ShapeDtypeStruct((B_pad, C), jnp.float32),
        grid_spec=pltpu.PrefetchScalarGridSpec(
            num_scalar_prefetch=0,
            grid=(B_pad // B_tile,),
            in_specs=[
                pl.BlockSpec((T, B_tile), lambda i: (0, i)),
                pl.BlockSpec((3, V, C), lambda i: (0, 0, 0)),
                pl.BlockSpec((3, C, C), lambda i: (0, 0, 0)),
                pl.BlockSpec((1, C), lambda i: (0, 0)),
                pl.BlockSpec((1, C), lambda i: (0, 0)),
            ],
            out_specs=pl.BlockSpec((B_tile, C), lambda i: (i, 0)),
            scratch_shapes=[pltpu.VMEM((T, B_tile, C), jnp.float32),
                            pltpu.VMEM((T, B_tile, C), jnp.float32)],
        ),
        compiler_params=pltpu.CompilerParams(
            dimension_semantics=("parallel",)),
    )(ids_tm, G, W2, b1, b2)
    return out[:B]


# --------------------------------------------------------------------------
# Deterministic parameter init (PyTorch-like defaults, torch weight layouts).
# --------------------------------------------------------------------------
def init_params(key, voc_size, emb_dim, out_dim):
    keys = jax.random.split(key, 5)
    emb = jax.random.normal(keys[0], (voc_size, emb_dim), jnp.float32)
    emb = emb.at[0].set(0.0)                      # padding_idx=0

    def conv_init(kw, kb, out_c, in_c, ksize):
        bound = 1.0 / (in_c * ksize) ** 0.5       # nn.Conv1d default init
        w = jax.random.uniform(kw, (out_c, in_c, ksize), jnp.float32,
                               -bound, bound)
        b = jax.random.uniform(kb, (out_c,), jnp.float32, -bound, bound)
        return w, b

    w1, b1 = conv_init(keys[1], keys[2], out_dim, emb_dim, 3)
    w2, b2 = conv_init(keys[3], keys[4], out_dim, out_dim, 3)
    return {"emb": emb, "w1": w1, "b1": b1, "w2": w2, "b2": b2}


# --------------------------------------------------------------------------
# Pure-JAX reference (independent of the kernel) for a correctness check.
# --------------------------------------------------------------------------
def reference_forward(char_ids, params, out_dim):
    x = jnp.take(params["emb"], char_ids, axis=0)        # (B, T, E)
    x = jnp.transpose(x, (0, 2, 1))                      # (B, E, T) == NCW

    def conv_relu(inp, w, b):
        y = lax.conv_general_dilated(
            inp, w, window_strides=(1,), padding=[(1, 1)],
            dimension_numbers=("NCW", "OIW", "NCW"),
            precision=lax.Precision.HIGHEST)
        return jax.nn.relu(y + b[None, :, None])

    h = conv_relu(x, params["w1"], params["b1"])
    z = conv_relu(h, params["w2"], params["b2"])
    return jnp.max(z, axis=2)                            # AdaptiveMaxPool1d(1).squeeze(2)


if __name__ == "__main__":
    # Small shapes consistent with the module: 4 character sequences, char
    # vocab 30, char-embedding dim 16, out_dim 32, padded length 12.
    VOC_SIZE = 30
    EMB_DIM = 16
    OUT_DIM = 32
    B, T = 4, 12

    key = jax.random.PRNGKey(0)
    pkey, dkey = jax.random.split(key)
    params = init_params(pkey, VOC_SIZE, EMB_DIM, OUT_DIM)

    # Variable-length char-id sequences, 0-padded to the batch max length
    # (exactly what torch pad_sequence(batch_first=True) produces).
    lengths = jnp.array([7, 3, 12, 5], dtype=jnp.int32)
    raw_ids = jax.random.randint(dkey, (B, T), 1, VOC_SIZE, dtype=jnp.int32)
    pos = jnp.arange(T)[None, :]
    char_ids = jnp.where(pos < lengths[:, None], raw_ids, 0).astype(jnp.int32)

    out = character_conv_forward(char_ids, params, out_dim=OUT_DIM)
    out = jax.block_until_ready(out)
    assert out.shape == (B, OUT_DIM), out.shape

    ref = reference_forward(char_ids, params, OUT_DIM)
    err = float(jnp.max(jnp.abs(out - ref)))
    assert jnp.allclose(out, ref, atol=1e-3, rtol=1e-3), err

    print("KERNEL_OK")
</pallas_src>

<mosaic_0001>
module attributes {stable_mosaic.version = 11 : i64} {
  func.func @_char_conv_kernel(%arg0: i32, %arg1: memref<12x8xi32, #tpu.memory_space<vmem>>, %arg2: memref<3x30x32xf32, #tpu.memory_space<vmem>>, %arg3: memref<3x32x32xf32, #tpu.memory_space<vmem>>, %arg4: memref<1x32xf32, #tpu.memory_space<vmem>>, %arg5: memref<1x32xf32, #tpu.memory_space<vmem>>, %arg6: memref<8x32xf32, #tpu.memory_space<vmem>>, %arg7: memref<12x8x32xf32, #tpu.memory_space<vmem>>, %arg8: memref<12x8x32xf32, #tpu.memory_space<vmem>>) attributes {dimension_semantics = [#tpu.dimension_semantics<parallel>], iteration_bounds = array<i64: 1>, scalar_prefetch = 0 : i64, scratch_operands = 2 : i64, tpu.core_type = #tpu.core_type<tc>, window_params = [{transform_indices = @transform_0, window_bounds = array<i64: 12, 8>}, {pipeline_mode = #tpu.pipeline_mode<synchronous>, transform_indices = @transform_1, window_bounds = array<i64: 3, 30, 32>}, {pipeline_mode = #tpu.pipeline_mode<synchronous>, transform_indices = @transform_2, window_bounds = array<i64: 3, 32, 32>}, {pipeline_mode = #tpu.pipeline_mode<synchronous>, transform_indices = @transform_3, window_bounds = array<i64: 1, 32>}, {pipeline_mode = #tpu.pipeline_mode<synchronous>, transform_indices = @transform_4, window_bounds = array<i64: 1, 32>}, {transform_indices = @transform_5, window_bounds = array<i64: 8, 32>}]} {
    %c0 = arith.constant 0 : index
    %c0_0 = arith.constant 0 : index
    %0 = vector.load %arg1[%c0, %c0_0] : memref<12x8xi32, #tpu.memory_space<vmem>>, vector<12x8xi32>
    %1 = tpu.iota {dimensions = array<i32: 2>} : vector<12x8x30xi32>
    %2 = vector.shape_cast %0 : vector<12x8xi32> to vector<12x8x1xi32>
    %3 = vector.broadcast %2 : vector<12x8x1xi32> to vector<12x8x30xi32>
    %4 = arith.cmpi eq, %3, %1 : vector<12x8x30xi32>
    %5 = arith.extui %4 : vector<12x8x30xi1> to vector<12x8x30xi32>
    %6 = arith.sitofp %5 : vector<12x8x30xi32> to vector<12x8x30xf32>
    %c1 = arith.constant 1 : index
    %c0_1 = arith.constant 0 : index
    %c0_2 = arith.constant 0 : index
    %7 = vector.load %arg2[%c1, %c0_1, %c0_2] : memref<3x30x32xf32, #tpu.memory_space<vmem>>, vector<1x30x32xf32>
    %8 = vector.shape_cast %7 : vector<1x30x32xf32> to vector<30x32xf32>
    %9 = vector.shape_cast %6 : vector<12x8x30xf32> to vector<96x30xf32>
    %cst = arith.constant dense<0.000000e+00> : vector<96x32xf32>
    %10 = tpu.matmul %9, %8, %cst {dimension_numbers = #tpu.dot_dimension_numbers<[1], [0], [0], [1], [0, 0, 1, 1], [], []>} : vector<96x30xf32>, vector<30x32xf32>, vector<96x32xf32> -> vector<96x32xf32>
    %11 = vector.shape_cast %10 : vector<96x32xf32> to vector<12x8x32xf32>
    %c0_3 = arith.constant 0 : index
    %c0_4 = arith.constant 0 : index
    %12 = vector.load %arg4[%c0_3, %c0_4] : memref<1x32xf32, #tpu.memory_space<vmem>>, vector<1x32xf32>
    %13 = vector.shape_cast %12 : vector<1x32xf32> to vector<1x1x32xf32>
    %14 = vector.broadcast %13 : vector<1x1x32xf32> to vector<12x8x32xf32>
    %15 = arith.addf %11, %14 : vector<12x8x32xf32>
    %c0_5 = arith.constant 0 : index
    %c0_6 = arith.constant 0 : index
    %c0_7 = arith.constant 0 : index
    %16 = vector.load %arg7[%c0_5, %c0_6, %c0_7] : memref<12x8x32xf32, #tpu.memory_space<vmem>>, vector<12x8x32xf32>
    tpu.vector_store %arg7[%c0_5, %c0_6, %c0_7], %15 {strides = array<i32>} : memref<12x8x32xf32, #tpu.memory_space<vmem>>, vector<12x8x32xf32>,
    %c1_8 = arith.constant 1 : index
    %c0_9 = arith.constant 0 : index
    %c0_10 = arith.constant 0 : index
    %17 = vector.load %arg7[%c1_8, %c0_9, %c0_10] : memref<12x8x32xf32, #tpu.memory_space<vmem>>, vector<11x8x32xf32>
    %18 = vector.extract_strided_slice %6 {offsets = [0, 0, 0], sizes = [11, 8, 30], strides = [1, 1, 1]} : vector<12x8x30xf32> to vector<11x8x30xf32>
    %c0_11 = arith.constant 0 : index
    %c0_12 = arith.constant 0 : index
    %c0_13 = arith.constant 0 : index
    %19 = vector.load %arg2[%c0_11, %c0_12, %c0_13] : memref<3x30x32xf32, #tpu.memory_space<vmem>>, vector<1x30x32xf32>
    %20 = vector.shape_cast %19 : vector<1x30x32xf32> to vector<30x32xf32>
    %21 = vector.shape_cast %18 : vector<11x8x30xf32> to vector<88x30xf32>
    %cst_14 = arith.constant dense<0.000000e+00> : vector<88x32xf32>
    %22 = tpu.matmul %21, %20, %cst_14 {dimension_numbers = #tpu.dot_dimension_numbers<[1], [0], [0], [1], [0, 0, 1, 1], [], []>} : vector<88x30xf32>, vector<30x32xf32>, vector<88x32xf32> -> vector<88x32xf32>
    %23 = vector.shape_cast %22 : vector<88x32xf32> to vector<11x8x32xf32>
    %24 = arith.addf %17, %23 : vector<11x8x32xf32>
    %c1_15 = arith.constant 1 : index
    %c0_16 = arith.constant 0 : index
    %c0_17 = arith.constant 0 : index
    %25 = vector.load %arg7[%c1_15, %c0_16, %c0_17] : memref<12x8x32xf32, #tpu.memory_space<vmem>>, vector<11x8x32xf32>
    tpu.vector_store %arg7[%c1_15, %c0_16, %c0_17], %24 {strides = array<i32>} : memref<12x8x32xf32, #tpu.memory_space<vmem>>, vector<11x8x32xf32>,
    %c0_18 = arith.constant 0 : index
    %c0_19 = arith.constant 0 : index
    %c0_20 = arith.constant 0 : index
    %26 = vector.load %arg7[%c0_18, %c0_19, %c0_20] : memref<12x8x32xf32, #tpu.memory_space<vmem>>, vector<11x8x32xf32>
    %27 = vector.extract_strided_slice %6 {offsets = [1, 0, 0], sizes = [11, 8, 30], strides = [1, 1, 1]} : vector<12x8x30xf32> to vector<11x8x30xf32>
    %c2 = arith.constant 2 : index
    %c0_21 = arith.constant 0 : index
    %c0_22 = arith.constant 0 : index
    %28 = vector.load %arg2[%c2, %c0_21, %c0_22] : memref<3x30x32xf32, #tpu.memory_space<vmem>>, vector<1x30x32xf32>
    %29 = vector.shape_cast %28 : vector<1x30x32xf32> to vector<30x32xf32>
    %30 = vector.shape_cast %27 : vector<11x8x30xf32> to vector<88x30xf32>
    %cst_23 = arith.constant dense<0.000000e+00> : vector<88x32xf32>
    %31 = tpu.matmul %30, %29, %cst_23 {dimension_numbers = #tpu.dot_dimension_numbers<[1], [0], [0], [1], [0, 0, 1, 1], [], []>} : vector<88x30xf32>, vector<30x32xf32>, vector<88x32xf32> -> vector<88x32xf32>
    %32 = vector.shape_cast %31 : vector<88x32xf32> to vector<11x8x32xf32>
    %33 = arith.addf %26, %32 : vector<11x8x32xf32>
    %c0_24 = arith.constant 0 : index
    %c0_25 = arith.constant 0 : index
    %c0_26 = arith.constant 0 : index
    %34 = vector.load %arg7[%c0_24, %c0_25, %c0_26] : memref<12x8x32xf32, #tpu.memory_space<vmem>>, vector<11x8x32xf32>
    tpu.vector_store %arg7[%c0_24, %c0_25, %c0_26], %33 {strides = array<i32>} : memref<12x8x32xf32, #tpu.memory_space<vmem>>, vector<11x8x32xf32>,
    %c0_27 = arith.constant 0 : index
    %c0_28 = arith.constant 0 : index
    %c0_29 = arith.constant 0 : index
    %35 = vector.load %arg7[%c0_27, %c0_28, %c0_29] : memref<12x8x32xf32, #tpu.memory_space<vmem>>, vector<12x8x32xf32>
    %cst_30 = arith.constant 0.000000e+00 : f32
    %36 = vector.broadcast %cst_30 : f32 to vector<12x8x32xf32>
    %37 = arith.maximumf %35, %36 : vector<12x8x32xf32>
    %c0_31 = arith.constant 0 : index
    %c0_32 = arith.constant 0 : index
    %c0_33 = arith.constant 0 : index
    %38 = vector.load %arg7[%c0_31, %c0_32, %c0_33] : memref<12x8x32xf32, #tpu.memory_space<vmem>>, vector<12x8x32xf32>
    tpu.vector_store %arg7[%c0_31, %c0_32, %c0_33], %37 {strides = array<i32>} : memref<12x8x32xf32, #tpu.memory_space<vmem>>, vector<12x8x32xf32>,
    %c0_34 = arith.constant 0 : index
    %c0_35 = arith.constant 0 : index
    %c0_36 = arith.constant 0 : index
    %39 = vector.load %arg7[%c0_34, %c0_35, %c0_36] : memref<12x8x32xf32, #tpu.memory_space<vmem>>, vector<12x8x32xf32>
    %c1_37 = arith.constant 1 : index
    %c0_38 = arith.constant 0 : index
    %c0_39 = arith.constant 0 : index
    %40 = vector.load %arg3[%c1_37, %c0_38, %c0_39] : memref<3x32x32xf32, #tpu.memory_space<vmem>>, vector<1x32x32xf32>
    %41 = vector.shape_cast %40 : vector<1x32x32xf32> to vector<32x32xf32>
    %42 = vector.shape_cast %39 : vector<12x8x32xf32> to vector<96x32xf32>
    %cst_40 = arith.constant dense<0.000000e+00> : vector<96x32xf32>
    %43 = tpu.matmul %42, %41, %cst_40 {dimension_numbers = #tpu.dot_dimension_numbers<[1], [0], [0], [1], [0, 0, 1, 1], [], []>} : vector<96x32xf32>, vector<32x32xf32>, vector<96x32xf32> -> vector<96x32xf32>
    %44 = vector.shape_cast %43 : vector<96x32xf32> to vector<12x8x32xf32>
    %c0_41 = arith.constant 0 : index
    %c0_42 = arith.constant 0 : index
    %45 = vector.load %arg5[%c0_41, %c0_42] : memref<1x32xf32, #tpu.memory_space<vmem>>, vector<1x32xf32>
    %46 = vector.shape_cast %45 : vector<1x32xf32> to vector<1x1x32xf32>
    %47 = vector.broadcast %46 : vector<1x1x32xf32> to vector<12x8x32xf32>
    %48 = arith.addf %44, %47 : vector<12x8x32xf32>
    %c0_43 = arith.constant 0 : index
    %c0_44 = arith.constant 0 : index
    %c0_45 = arith.constant 0 : index
    %49 = vector.load %arg8[%c0_43, %c0_44, %c0_45] : memref<12x8x32xf32, #tpu.memory_space<vmem>>, vector<12x8x32xf32>
    tpu.vector_store %arg8[%c0_43, %c0_44, %c0_45], %48 {strides = array<i32>} : memref<12x8x32xf32, #tpu.memory_space<vmem>>, vector<12x8x32xf32>,
    %c1_46 = arith.constant 1 : index
    %c0_47 = arith.constant 0 : index
    %c0_48 = arith.constant 0 : index
    %50 = vector.load %arg8[%c1_46, %c0_47, %c0_48] : memref<12x8x32xf32, #tpu.memory_space<vmem>>, vector<11x8x32xf32>
    %c0_49 = arith.constant 0 : index
    %c0_50 = arith.constant 0 : index
    %c0_51 = arith.constant 0 : index
    %51 = vector.load %arg7[%c0_49, %c0_50, %c0_51] : memref<12x8x32xf32, #tpu.memory_space<vmem>>, vector<11x8x32xf32>
    %c0_52 = arith.constant 0 : index
    %c0_53 = arith.constant 0 : index
    %c0_54 = arith.constant 0 : index
    %52 = vector.load %arg3[%c0_52, %c0_53, %c0_54] : memref<3x32x32xf32, #tpu.memory_space<vmem>>, vector<1x32x32xf32>
    %53 = vector.shape_cast %52 : vector<1x32x32xf32> to vector<32x32xf32>
    %54 = vector.shape_cast %51 : vector<11x8x32xf32> to vector<88x32xf32>
    %cst_55 = arith.constant dense<0.000000e+00> : vector<88x32xf32>
    %55 = tpu.matmul %54, %53, %cst_55 {dimension_numbers = #tpu.dot_dimension_numbers<[1], [0], [0], [1], [0, 0, 1, 1], [], []>} : vector<88x32xf32>, vector<32x32xf32>, vector<88x32xf32> -> vector<88x32xf32>
    %56 = vector.shape_cast %55 : vector<88x32xf32> to vector<11x8x32xf32>
    %57 = arith.addf %50, %56 : vector<11x8x32xf32>
    %c1_56 = arith.constant 1 : index
    %c0_57 = arith.constant 0 : index
    %c0_58 = arith.constant 0 : index
    %58 = vector.load %arg8[%c1_56, %c0_57, %c0_58] : memref<12x8x32xf32, #tpu.memory_space<vmem>>, vector<11x8x32xf32>
    tpu.vector_store %arg8[%c1_56, %c0_57, %c0_58], %57 {strides = array<i32>} : memref<12x8x32xf32, #tpu.memory_space<vmem>>, vector<11x8x32xf32>,
    %c0_59 = arith.constant 0 : index
    %c0_60 = arith.constant 0 : index
    %c0_61 = arith.constant 0 : index
    %59 = vector.load %arg8[%c0_59, %c0_60, %c0_61] : memref<12x8x32xf32, #tpu.memory_space<vmem>>, vector<11x8x32xf32>
    %c1_62 = arith.constant 1 : index
    %c0_63 = arith.constant 0 : index
    %c0_64 = arith.constant 0 : index
    %60 = vector.load %arg7[%c1_62, %c0_63, %c0_64] : memref<12x8x32xf32, #tpu.memory_space<vmem>>, vector<11x8x32xf32>
    %c2_65 = arith.constant 2 : index
    %c0_66 = arith.constant 0 : index
    %c0_67 = arith.constant 0 : index
    %61 = vector.load %arg3[%c2_65, %c0_66, %c0_67] : memref<3x32x32xf32, #tpu.memory_space<vmem>>, vector<1x32x32xf32>
    %62 = vector.shape_cast %61 : vector<1x32x32xf32> to vector<32x32xf32>
    %63 = vector.shape_cast %60 : vector<11x8x32xf32> to vector<88x32xf32>
    %cst_68 = arith.constant dense<0.000000e+00> : vector<88x32xf32>
    %64 = tpu.matmul %63, %62, %cst_68 {dimension_numbers = #tpu.dot_dimension_numbers<[1], [0], [0], [1], [0, 0, 1, 1], [], []>} : vector<88x32xf32>, vector<32x32xf32>, vector<88x32xf32> -> vector<88x32xf32>
    %65 = vector.shape_cast %64 : vector<88x32xf32> to vector<11x8x32xf32>
    %66 = arith.addf %59, %65 : vector<11x8x32xf32>
    %c0_69 = arith.constant 0 : index
    %c0_70 = arith.constant 0 : index
    %c0_71 = arith.constant 0 : index
    %67 = vector.load %arg8[%c0_69, %c0_70, %c0_71] : memref<12x8x32xf32, #tpu.memory_space<vmem>>, vector<11x8x32xf32>
    tpu.vector_store %arg8[%c0_69, %c0_70, %c0_71], %66 {strides = array<i32>} : memref<12x8x32xf32, #tpu.memory_space<vmem>>, vector<11x8x32xf32>,
    %c0_72 = arith.constant 0 : index
    %c0_73 = arith.constant 0 : index
    %c0_74 = arith.constant 0 : index
    %68 = vector.load %arg8[%c0_72, %c0_73, %c0_74] : memref<12x8x32xf32, #tpu.memory_space<vmem>>, vector<12x8x32xf32>
    %cst_75 = arith.constant 0.000000e+00 : f32
    %69 = vector.broadcast %cst_75 : f32 to vector<12x8x32xf32>
    %70 = arith.maximumf %68, %69 : vector<12x8x32xf32>
    %cst_76 = arith.constant dense<0xFF800000> : vector<8x32xf32>
    %71 = vector.multi_reduction <maximumf>, %70, %cst_76 [0] : vector<12x8x32xf32> to vector<8x32xf32>
    %c0_77 = arith.constant 0 : index
    %c0_78 = arith.constant 0 : index
    %72 = vector.load %arg6[%c0_77, %c0_78] : memref<8x32xf32, #tpu.memory_space<vmem>>, vector<8x32xf32>
    tpu.vector_store %arg6[%c0_77, %c0_78], %71 {strides = array<i32>} : memref<8x32xf32, #tpu.memory_space<vmem>>, vector<8x32xf32>,
    return
  }
  func.func @transform_0(%arg0: i32) -> (i32, i32) {
    %c0_i32 = arith.constant 0 : i32
    %c0_i32_0 = arith.constant 0 : i32
    return %c0_i32, %arg0 : i32, i32
  }
  func.func @transform_1(%arg0: i32) -> (i32, i32, i32) {
    %c0_i32 = arith.constant 0 : i32
    %c0_i32_0 = arith.constant 0 : i32
    %c0_i32_1 = arith.constant 0 : i32
    %c0_i32_2 = arith.constant 0 : i32
    return %c0_i32, %c0_i32_0, %c0_i32_1 : i32, i32, i32
  }
  func.func @transform_2(%arg0: i32) -> (i32, i32, i32) {
    %c0_i32 = arith.constant 0 : i32
    %c0_i32_0 = arith.constant 0 : i32
    %c0_i32_1 = arith.constant 0 : i32
    %c0_i32_2 = arith.constant 0 : i32
    return %c0_i32, %c0_i32_0, %c0_i32_1 : i32, i32, i32
  }
  func.func @transform_3(%arg0: i32) -> (i32, i32) {
    %c0_i32 = arith.constant 0 : i32
    %c0_i32_0 = arith.constant 0 : i32
    %c0_i32_1 = arith.constant 0 : i32
    return %c0_i32, %c0_i32_0 : i32, i32
  }
  func.func @transform_4(%arg0: i32) -> (i32, i32) {
    %c0_i32 = arith.constant 0 : i32
    %c0_i32_0 = arith.constant 0 : i32
    %c0_i32_1 = arith.constant 0 : i32
    return %c0_i32, %c0_i32_0 : i32, i32
  }
  func.func @transform_5(%arg0: i32) -> (i32, i32) {
    %c0_i32 = arith.constant 0 : i32
    %c0_i32_0 = arith.constant 0 : i32
    return %arg0, %c0_i32 : i32, i32
  }
}

</mosaic_0001>

<llo_original>
// kernel: character_conv_forward.1
$region0: #{character_conv_forward.1}
  #allocation0 [shape = 'u32[]', space=smem, size = 0x4, offset = 0x4, fixed_abs, tag = 'smem constant byte address 0x4 - core index']
  #allocation1 [shape = 'u32[72,128]{1,0:T(1,128)}', space=vmem, size = 0x9000, scoped, tag = 'internal scratch']
  #allocation2 [shape = 'f32[12,8,32]{2,1,0:T(8,128)}', space=vmem, size = 0xc000, scoped, tag = 'scratch operand']
  #allocation3 [shape = 'f32[12,8,32]{2,1,0:T(8,128)}', space=vmem, size = 0xc000, scoped, tag = 'scratch operand']
  %s0 = inlined_call_operand.vmem [shape: s32[12,8], index: 0, kind: input, shape index: {}]
  %s1 = inlined_call_operand.vmem [shape: f32[3,30,32], index: 1, kind: input, shape index: {}]
  %s2 = inlined_call_operand.vmem [shape: f32[3,32,32], index: 2, kind: input, shape index: {}]
  %s3 = inlined_call_operand.vmem [shape: f32[1,32], index: 3, kind: input, shape index: {}]
  %s4 = inlined_call_operand.vmem [shape: f32[1,32], index: 4, kind: input, shape index: {}]
  %s5 = inlined_call_operand.vmem [shape: f32[8,32], index: 5, kind: output, shape index: {}]
  %s6 = sld [smem:[#allocation0]]
  $region30: #{character_conv_forward.1} parent=0
    _
  %s8 = ssub.s32 1, %s6
  %s9 = scalar_select 0, %s8, %s6
  // Predicated region
  $region2: #{character_conv_forward.1} parent=0 // pred_check
    _
  $region3: #{character_conv_forward.1} parent=0 // pred_check_branch
    %11 = sbr.rel (0) target = $region5
  $region4: #{character_conv_forward.1} parent=0 // pred_region
    _
  $region5: #{character_conv_forward.1} parent=0 // pred_fallthru
    _
  // Predicated region
  $region6: #{character_conv_forward.1} parent=0 // pred_check
    _
  $region7: #{character_conv_forward.1} parent=0 // pred_check_branch
    %13 = sbr.rel (0) target = $region9
  $region8: #{character_conv_forward.1} parent=0 // pred_region
    _
  $region9: #{character_conv_forward.1} parent=0 // pred_fallthru
    _
  // Predicated region
  $region10: #{character_conv_forward.1} parent=0 // pred_check
    _
  $region11: #{character_conv_forward.1} parent=0 // pred_check_branch
    %15 = sbr.rel (0) target = $region13
  $region12: #{character_conv_forward.1} parent=0 // pred_region
    _
  $region13: #{character_conv_forward.1} parent=0 // pred_fallthru
    _
  // Predicated region
  $region14: #{character_conv_forward.1} parent=0 // pred_check
    _
  $region15: #{character_conv_forward.1} parent=0 // pred_check_branch
    %17 = sbr.rel (0) target = $region17
  $region16: #{character_conv_forward.1} parent=0 // pred_region
    _
  $region17: #{character_conv_forward.1} parent=0 // pred_fallthru
    _
  // Predicated region
  $region18: #{character_conv_forward.1} parent=0 // pred_check
    _
  $region19: #{character_conv_forward.1} parent=0 // pred_check_branch
    %19 = sbr.rel (0) target = $region21
  $region20: #{character_conv_forward.1} parent=0 // pred_region
    _
  $region21: #{character_conv_forward.1} parent=0 // pred_fallthru
    _
  %v20 = vld [vmem:[%s0] sm:$0xff]
  %v21 = vld [vmem:[%s0 + $0x8] sm:$0xf]
  %v22 = vlaneseq
  %v23 = vand.u32 %v22, 127
  %v24 = vperm.slane %v20, 0
  %v25 = vlaneseq
  %v26 = vshrl.u32 %v25, 7
  %28 = vset.pattern.permute.xlu0 %v26
  %29 = vperm.xlu0 %28, %v24
  %v30 = vpop.permute.xlu0 %29
  %v31 = vperm.slane %v20, 1
  %v32 = vlaneseq
  %v33 = vshrl.u32 %v32, 7
  %35 = vset.pattern.permute.xlu0 %v33
  %36 = vperm.xlu0 %35, %v31
  %v37 = vpop.permute.xlu0 %36
  %v38 = vperm.slane %v20, 2
  %v39 = vlaneseq
  %v40 = vshrl.u32 %v39, 7
  %42 = vset.pattern.permute.xlu0 %v40
  %43 = vperm.xlu0 %42, %v38
  %v44 = vpop.permute.xlu0 %43
  %v45 = vperm.slane %v20, 3
  %v46 = vlaneseq
  %v47 = vshrl.u32 %v46, 7
  %49 = vset.pattern.permute.xlu0 %v47
  %50 = vperm.xlu0 %49, %v45
  %v51 = vpop.permute.xlu0 %50
  %v52 = vperm.slane %v20, 4
  %v53 = vlaneseq
  %v54 = vshrl.u32 %v53, 7
  %56 = vset.pattern.permute.xlu0 %v54
  %57 = vperm.xlu0 %56, %v52
  %v58 = vpop.permute.xlu0 %57
  %v59 = vperm.slane %v20, 5
  %v60 = vlaneseq
  %v61 = vshrl.u32 %v60, 7
  %63 = vset.pattern.permute.xlu0 %v61
  %64 = vperm.xlu0 %63, %v59
  %v65 = vpop.permute.xlu0 %64
  %v66 = vperm.slane %v20, 6
  %v67 = vlaneseq
  %v68 = vshrl.u32 %v67, 7
  %70 = vset.pattern.permute.xlu0 %v68
  %71 = vperm.xlu0 %70, %v66
  %v72 = vpop.permute.xlu0 %71
  %v73 = vperm.slane %v20, 7
  %v74 = vlaneseq
  %v75 = vshrl.u32 %v74, 7
  %77 = vset.pattern.permute.xlu0 %v75
  %78 = vperm.xlu0 %77, %v73
  %v79 = vpop.permute.xlu0 %78
  %v80 = vperm.slane %v21, 0
  %v81 = vlaneseq
  %v82 = vshrl.u32 %v81, 7
  %84 = vset.pattern.permute.xlu0 %v82
  %85 = vperm.xlu0 %84, %v80
  %v86 = vpop.permute.xlu0 %85
  %v87 = vperm.slane %v21, 1
  %v88 = vlaneseq
  %v89 = vshrl.u32 %v88, 7
  %91 = vset.pattern.permute.xlu0 %v89
  %92 = vperm.xlu0 %91, %v87
  %v93 = vpop.permute.xlu0 %92
  %v94 = vperm.slane %v21, 2
  %v95 = vlaneseq
  %v96 = vshrl.u32 %v95, 7
  %98 = vset.pattern.permute.xlu0 %v96
  %99 = vperm.xlu0 %98, %v94
  %v100 = vpop.permute.xlu0 %99
  %v101 = vperm.slane %v21, 3
  %v102 = vlaneseq
  %v103 = vshrl.u32 %v102, 7
  %105 = vset.pattern.permute.xlu0 %v103
  %106 = vperm.xlu0 %105, %v101
  %v107 = vpop.permute.xlu0 %106
  %vm108 = vcmp.eq.s32.totalorder %v30, %v23
  %vm109 = vcmp.eq.s32.totalorder %v37, %v23
  %vm110 = vcmp.eq.s32.totalorder %v44, %v23
  %vm111 = vcmp.eq.s32.totalorder %v51, %v23
  %vm112 = vcmp.eq.s32.totalorder %v58, %v23
  %vm113 = vcmp.eq.s32.totalorder %v65, %v23
  %vm114 = vcmp.eq.s32.totalorder %v72, %v23
  %vm115 = vcmp.eq.s32.totalorder %v79, %v23
  %vm116 = vcmp.eq.s32.totalorder %v86, %v23
  %vm117 = vcmp.eq.s32.totalorder %v93, %v23
  %vm118 = vcmp.eq.s32.totalorder %v100, %v23
  %vm119 = vcmp.eq.s32.totalorder %v107, %v23
  %v120 = vsel %vm108, 1, 0
  %v121 = vsel %vm109, 1, 0
  %v122 = vsel %vm110, 1, 0
  %v123 = vsel %vm111, 1, 0
  %v124 = vsel %vm112, 1, 0
  %v125 = vsel %vm113, 1, 0
  %v126 = vsel %vm114, 1, 0
  %v127 = vsel %vm115, 1, 0
  %v128 = vsel %vm116, 1, 0
  %v129 = vsel %vm117, 1, 0
  %v130 = vsel %vm118, 1, 0
  %v131 = vsel %vm119, 1, 0
  %v132 = vcvt.s32.f32 %v120
  %v133 = vcvt.s32.f32 %v121
  %v134 = vcvt.s32.f32 %v122
  %v135 = vcvt.s32.f32 %v123
  %v136 = vcvt.s32.f32 %v124
  %v137 = vcvt.s32.f32 %v125
  %v138 = vcvt.s32.f32 %v126
  %v139 = vcvt.s32.f32 %v127
  %v140 = vcvt.s32.f32 %v128
  %v141 = vcvt.s32.f32 %v129
  %v142 = vcvt.s32.f32 %v130
  %v143 = vcvt.s32.f32 %v131
  %s144 = scalar_lea.vmem %s1, 32
  %v145 = vld [vmem:[%s144] sm:$0xff]
  %v146 = vld [vmem:[%s144 + $0x8] sm:$0xff]
  %v147 = vld [vmem:[%s144 + $0x10] sm:$0xff]
  %v148 = vld [vmem:[%s144 + $0x18] sm:$0x3f]
  %vm149 = vcmask 244736
  %v151 = vsel %vm149, %v132, 0
  %v154 = vsel %vm149, %v133, 0
  %v157 = vsel %vm149, %v134, 0
  %v160 = vsel %vm149, %v135, 0
  %v163 = vsel %vm149, %v136, 0
  %v166 = vsel %vm149, %v137, 0
  %v169 = vsel %vm149, %v138, 0
  %v172 = vsel %vm149, %v139, 0
  %v175 = vsel %vm149, %v140, 0
  %v178 = vsel %vm149, %v141, 0
  %v181 = vsel %vm149, %v142, 0
  %v184 = vsel %vm149, %v143, 0
  %vm186 = vcmask 1045504
  %v188 = vsel %vm186, %v148, 0
  %190 = vmatpush.msra.mxu0 0.0
  %191 = vmatpush.msra.mxu0 0.0
  %192 = vmatpush.msra.mxu0 0.0
  %193 = vmatpush.msra.mxu0 0.0
  %194 = vmatpush.msra.mxu0 0.0
  %195 = vmatpush.msra.mxu0 0.0
  %196 = vmatpush.msra.mxu0 0.0
  %197 = vmatpush.msra.mxu0 0.0
  %198 = vmatpush.msra.mxu0 0.0
  %199 = vmatpush.msra.mxu0 0.0
  %200 = vmatpush.msra.mxu0 0.0
  %201 = vmatpush.msra.mxu0 0.0
  %202 = vmatpush.msra.mxu0 %v188
  %203 = vmatpush.msra.mxu0 %v147
  %204 = vmatpush.msra.mxu0 %v146
  %205 = vmatpush.msra.mxu0 %v145
  %206 = vmatmul.f32.gmra.mxu0 %v151
  %v207 = vpop.f32.mrf.mxu0
  %v208 = vadd.f32 0.0, %v207
  %209 = vmatmul.f32.gmra.mxu0 %v154
  %v210 = vpop.f32.mrf.mxu0
  %v211 = vadd.f32 0.0, %v210
  %212 = vmatmul.f32.gmra.mxu0 %v157
  %v213 = vpop.f32.mrf.mxu0
  %v214 = vadd.f32 0.0, %v213
  %215 = vmatmul.f32.gmra.mxu0 %v160
  %v216 = vpop.f32.mrf.mxu0
  %v217 = vadd.f32 0.0, %v216
  %218 = vmatmul.f32.gmra.mxu0 %v163
  %v219 = vpop.f32.mrf.mxu0
  %v220 = vadd.f32 0.0, %v219
  %221 = vmatmul.f32.gmra.mxu0 %v166
  %v222 = vpop.f32.mrf.mxu0
  %v223 = vadd.f32 0.0, %v222
  %224 = vmatmul.f32.gmra.mxu0 %v169
  %v225 = vpop.f32.mrf.mxu0
  %v226 = vadd.f32 0.0, %v225
  %227 = vmatmul.f32.gmra.mxu0 %v172
  %v228 = vpop.f32.mrf.mxu0
  %v229 = vadd.f32 0.0, %v228
  %230 = vmatmul.f32.gmra.mxu0 %v175
  %v231 = vpop.f32.mrf.mxu0
  %v232 = vadd.f32 0.0, %v231
  %233 = vmatmul.f32.gmra.mxu0 %v178
  %v234 = vpop.f32.mrf.mxu0
  %v235 = vadd.f32 0.0, %v234
  %236 = vmatmul.f32.gmra.mxu0 %v181
  %v237 = vpop.f32.mrf.mxu0
  %v238 = vadd.f32 0.0, %v237
  %239 = vmatmul.f32.gmra.mxu0 %v184
  %v240 = vpop.f32.mrf.mxu0
  %v241 = vadd.f32 0.0, %v240
  %242 = vdwg.mxu0
  %v243 = vld [vmem:[%s3] sm:$0x1]
  %v245 = vperm.slane %v243, 0
  %v247 = vadd.f32 %v208, %v245
  %v248 = vadd.f32 %v211, %v245
  %v249 = vadd.f32 %v214, %v245
  %v250 = vadd.f32 %v217, %v245
  %v251 = vadd.f32 %v220, %v245
  %v252 = vadd.f32 %v223, %v245
  %v253 = vadd.f32 %v226, %v245
  %v254 = vadd.f32 %v229, %v245
  %v255 = vadd.f32 %v232, %v245
  %v256 = vadd.f32 %v235, %v245
  %v257 = vadd.f32 %v238, %v245
  %v258 = vadd.f32 %v241, %v245
  %vm259 = vcmask 261120
  %260 = vst.msk [vmem:[#allocation2] sm:$0xff] %vm259, %v247
  %261 = vst.msk [vmem:[#allocation2 + $0x8] sm:$0xff] %vm259, %v248
  %262 = vst.msk [vmem:[#allocation2 + $0x10] sm:$0xff] %vm259, %v249
  %263 = vst.msk [vmem:[#allocation2 + $0x18] sm:$0xff] %vm259, %v250
  %264 = vst.msk [vmem:[#allocation2 + $0x20] sm:$0xff] %vm259, %v251
  %265 = vst.msk [vmem:[#allocation2 + $0x28] sm:$0xff] %vm259, %v252
  %266 = vst.msk [vmem:[#allocation2 + $0x30] sm:$0xff] %vm259, %v253
  %267 = vst.msk [vmem:[#allocation2 + $0x38] sm:$0xff] %vm259, %v254
  %268 = vst.msk [vmem:[#allocation2 + $0x40] sm:$0xff] %vm259, %v255
  %269 = vst.msk [vmem:[#allocation2 + $0x48] sm:$0xff] %vm259, %v256
  %270 = vst.msk [vmem:[#allocation2 + $0x50] sm:$0xff] %vm259, %v257
  %271 = vst.msk [vmem:[#allocation2 + $0x58] sm:$0xff] %vm259, %v258
  %s272 = scalar_lea.vmem [#allocation2], 8
  %v273 = vld [vmem:[%s272] sm:$0xff]
  %v274 = vld [vmem:[%s272 + $0x8] sm:$0xff]
  %v275 = vld [vmem:[%s272 + $0x10] sm:$0xff]
  %v276 = vld [vmem:[%s272 + $0x18] sm:$0xff]
  %v277 = vld [vmem:[%s272 + $0x20] sm:$0xff]
  %v278 = vld [vmem:[%s272 + $0x28] sm:$0xff]
  %v279 = vld [vmem:[%s272 + $0x30] sm:$0xff]
  %v280 = vld [vmem:[%s272 + $0x38] sm:$0xff]
  %v281 = vld [vmem:[%s272 + $0x40] sm:$0xff]
  %v282 = vld [vmem:[%s272 + $0x48] sm:$0xff]
  %v283 = vld [vmem:[%s272 + $0x50] sm:$0xff]
  %v284 = vld [vmem:[%s1] sm:$0xff]
  %v285 = vld [vmem:[%s1 + $0x8] sm:$0xff]
  %v286 = vld [vmem:[%s1 + $0x10] sm:$0xff]
  %v287 = vld [vmem:[%s1 + $0x18] sm:$0x3f]
  %v289 = vsel %vm186, %v287, 0
  %291 = vmatpush.msra.mxu0 0.0
  %292 = vmatpush.msra.mxu0 0.0
  %293 = vmatpush.msra.mxu0 0.0
  %294 = vmatpush.msra.mxu0 0.0
  %295 = vmatpush.msra.mxu0 0.0
  %296 = vmatpush.msra.mxu0 0.0
  %297 = vmatpush.msra.mxu0 0.0
  %298 = vmatpush.msra.mxu0 0.0
  %299 = vmatpush.msra.mxu0 0.0
  %300 = vmatpush.msra.mxu0 0.0
  %301 = vmatpush.msra.mxu0 0.0
  %302 = vmatpush.msra.mxu0 0.0
  %303 = vmatpush.msra.mxu0 %v289
  %304 = vmatpush.msra.mxu0 %v286
  %305 = vmatpush.msra.mxu0 %v285
  %306 = vmatpush.msra.mxu0 %v284
  %307 = vmatmul.f32.gmra.mxu0 %v151
  %v308 = vpop.f32.mrf.mxu0
  %v309 = vadd.f32 0.0, %v308
  %310 = vmatmul.f32.gmra.mxu0 %v154
  %v311 = vpop.f32.mrf.mxu0
  %v312 = vadd.f32 0.0, %v311
  %313 = vmatmul.f32.gmra.mxu0 %v157
  %v314 = vpop.f32.mrf.mxu0
  %v315 = vadd.f32 0.0, %v314
  %316 = vmatmul.f32.gmra.mxu0 %v160
  %v317 = vpop.f32.mrf.mxu0
  %v318 = vadd.f32 0.0, %v317
  %319 = vmatmul.f32.gmra.mxu0 %v163
  %v320 = vpop.f32.mrf.mxu0
  %v321 = vadd.f32 0.0, %v320
  %322 = vmatmul.f32.gmra.mxu0 %v166
  %v323 = vpop.f32.mrf.mxu0
  %v324 = vadd.f32 0.0, %v323
  %325 = vmatmul.f32.gmra.mxu0 %v169
  %v326 = vpop.f32.mrf.mxu0
  %v327 = vadd.f32 0.0, %v326
  %328 = vmatmul.f32.gmra.mxu0 %v172
  %v329 = vpop.f32.mrf.mxu0
  %v330 = vadd.f32 0.0, %v329
  %331 = vmatmul.f32.gmra.mxu0 %v175
  %v332 = vpop.f32.mrf.mxu0
  %v333 = vadd.f32 0.0, %v332
  %334 = vmatmul.f32.gmra.mxu0 %v178
  %v335 = vpop.f32.mrf.mxu0
  %v336 = vadd.f32 0.0, %v335
  %337 = vmatmul.f32.gmra.mxu0 %v181
  %v338 = vpop.f32.mrf.mxu0
  %v339 = vadd.f32 0.0, %v338
  %340 = vdwg.mxu0
  %v341 = vadd.f32 %v273, %v309
  %v342 = vadd.f32 %v274, %v312
  %v343 = vadd.f32 %v275, %v315
  %v344 = vadd.f32 %v276, %v318
  %v345 = vadd.f32 %v277, %v321
  %v346 = vadd.f32 %v278, %v324
  %v347 = vadd.f32 %v279, %v327
  %v348 = vadd.f32 %v280, %v330
  %v349 = vadd.f32 %v281, %v333
  %v350 = vadd.f32 %v282, %v336
  %v351 = vadd.f32 %v283, %v339
  %352 = vst.msk [vmem:[%s272] sm:$0xff] %vm259, %v341
  %353 = vst.msk [vmem:[%s272 + $0x8] sm:$0xff] %vm259, %v342
  %354 = vst.msk [vmem:[%s272 + $0x10] sm:$0xff] %vm259, %v343
  %355 = vst.msk [vmem:[%s272 + $0x18] sm:$0xff] %vm259, %v344
  %356 = vst.msk [vmem:[%s272 + $0x20] sm:$0xff] %vm259, %v345
  %357 = vst.msk [vmem:[%s272 + $0x28] sm:$0xff] %vm259, %v346
  %358 = vst.msk [vmem:[%s272 + $0x30] sm:$0xff] %vm259, %v347
  %359 = vst.msk [vmem:[%s272 + $0x38] sm:$0xff] %vm259, %v348
  %360 = vst.msk [vmem:[%s272 + $0x40] sm:$0xff] %vm259, %v349
  %361 = vst.msk [vmem:[%s272 + $0x48] sm:$0xff] %vm259, %v350
  %362 = vst.msk [vmem:[%s272 + $0x50] sm:$0xff] %vm259, %v351
  %v363 = vld [vmem:[#allocation2] sm:$0xff]
  %v364 = vld [vmem:[#allocation2 + $0x8] sm:$0xff]
  %v365 = vld [vmem:[#allocation2 + $0x10] sm:$0xff]
  %v366 = vld [vmem:[#allocation2 + $0x18] sm:$0xff]
  %v367 = vld [vmem:[#allocation2 + $0x20] sm:$0xff]
  %v368 = vld [vmem:[#allocation2 + $0x28] sm:$0xff]
  %v369 = vld [vmem:[#allocation2 + $0x30] sm:$0xff]
  %v370 = vld [vmem:[#allocation2 + $0x38] sm:$0xff]
  %v371 = vld [vmem:[#allocation2 + $0x40] sm:$0xff]
  %v372 = vld [vmem:[#allocation2 + $0x48] sm:$0xff]
  %v373 = vld [vmem:[#allocation2 + $0x50] sm:$0xff]
  %s374 = scalar_lea.vmem %s1, 64
  %v375 = vld [vmem:[%s374] sm:$0xff]
  %v376 = vld [vmem:[%s374 + $0x8] sm:$0xff]
  %v377 = vld [vmem:[%s374 + $0x10] sm:$0xff]
  %v378 = vld [vmem:[%s374 + $0x18] sm:$0x3f]
  %v380 = vsel %vm186, %v378, 0
  %382 = vmatpush.msra.mxu0 0.0
  %383 = vmatpush.msra.mxu0 0.0
  %384 = vmatpush.msra.mxu0 0.0
  %385 = vmatpush.msra.mxu0 0.0
  %386 = vmatpush.msra.mxu0 0.0
  %387 = vmatpush.msra.mxu0 0.0
  %388 = vmatpush.msra.mxu0 0.0
  %389 = vmatpush.msra.mxu0 0.0
  %390 = vmatpush.msra.mxu0 0.0
  %391 = vmatpush.msra.mxu0 0.0
  %392 = vmatpush.msra.mxu0 0.0
  %393 = vmatpush.msra.mxu0 0.0
  %394 = vmatpush.msra.mxu0 %v380
  %395 = vmatpush.msra.mxu0 %v377
  %396 = vmatpush.msra.mxu0 %v376
  %397 = vmatpush.msra.mxu0 %v375
  %398 = vmatmul.f32.gmra.mxu0 %v154
  %v399 = vpop.f32.mrf.mxu0
  %v400 = vadd.f32 0.0, %v399
  %401 = vmatmul.f32.gmra.mxu0 %v157
  %v402 = vpop.f32.mrf.mxu0
  %v403 = vadd.f32 0.0, %v402
  %404 = vmatmul.f32.gmra.mxu0 %v160
  %v405 = vpop.f32.mrf.mxu0
  %v406 = vadd.f32 0.0, %v405
  %407 = vmatmul.f32.gmra.mxu0 %v163
  %v408 = vpop.f32.mrf.mxu0
  %v409 = vadd.f32 0.0, %v408
  %410 = vmatmul.f32.gmra.mxu0 %v166
  %v411 = vpop.f32.mrf.mxu0
  %v412 = vadd.f32 0.0, %v411
  %413 = vmatmul.f32.gmra.mxu0 %v169
  %v414 = vpop.f32.mrf.mxu0
  %v415 = vadd.f32 0.0, %v414
  %416 = vmatmul.f32.gmra.mxu0 %v172
  %v417 = vpop.f32.mrf.mxu0
  %v418 = vadd.f32 0.0, %v417
  %419 = vmatmul.f32.gmra.mxu0 %v175
  %v420 = vpop.f32.mrf.mxu0
  %v421 = vadd.f32 0.0, %v420
  %422 = vmatmul.f32.gmra.mxu0 %v178
  %v423 = vpop.f32.mrf.mxu0
  %v424 = vadd.f32 0.0, %v423
  %425 = vmatmul.f32.gmra.mxu0 %v181
  %v426 = vpop.f32.mrf.mxu0
  %v427 = vadd.f32 0.0, %v426
  %428 = vmatmul.f32.gmra.mxu0 %v184
  %v429 = vpop.f32.mrf.mxu0
  %v430 = vadd.f32 0.0, %v429
  %431 = vdwg.mxu0
  %v432 = vadd.f32 %v363, %v400
  %v433 = vadd.f32 %v364, %v403
  %v434 = vadd.f32 %v365, %v406
  %v435 = vadd.f32 %v366, %v409
  %v436 = vadd.f32 %v367, %v412
  %v437 = vadd.f32 %v368, %v415
  %v438 = vadd.f32 %v369, %v418
  %v439 = vadd.f32 %v370, %v421
  %v440 = vadd.f32 %v371, %v424
  %v441 = vadd.f32 %v372, %v427
  %v442 = vadd.f32 %v373, %v430
  %443 = vst.msk [vmem:[#allocation2] sm:$0xff] %vm259, %v432
  %444 = vst.msk [vmem:[#allocation2 + $0x8] sm:$0xff] %vm259, %v433
  %445 = vst.msk [vmem:[#allocation2 + $0x10] sm:$0xff] %vm259, %v434
  %446 = vst.msk [vmem:[#allocation2 + $0x18] sm:$0xff] %vm259, %v435
  %447 = vst.msk [vmem:[#allocation2 + $0x20] sm:$0xff] %vm259, %v436
  %448 = vst.msk [vmem:[#allocation2 + $0x28] sm:$0xff] %vm259, %v437
  %449 = vst.msk [vmem:[#allocation2 + $0x30] sm:$0xff] %vm259, %v438
  %450 = vst.msk [vmem:[#allocation2 + $0x38] sm:$0xff] %vm259, %v439
  %451 = vst.msk [vmem:[#allocation2 + $0x40] sm:$0xff] %vm259, %v440
  %452 = vst.msk [vmem:[#allocation2 + $0x48] sm:$0xff] %vm259, %v441
  %453 = vst.msk [vmem:[#allocation2 + $0x50] sm:$0xff] %vm259, %v442
  %v454 = vld [vmem:[#allocation2] sm:$0xff]
  %v455 = vld [vmem:[#allocation2 + $0x8] sm:$0xff]
  %v456 = vld [vmem:[#allocation2 + $0x10] sm:$0xff]
  %v457 = vld [vmem:[#allocation2 + $0x18] sm:$0xff]
  %v458 = vld [vmem:[#allocation2 + $0x20] sm:$0xff]
  %v459 = vld [vmem:[#allocation2 + $0x28] sm:$0xff]
  %v460 = vld [vmem:[#allocation2 + $0x30] sm:$0xff]
  %v461 = vld [vmem:[#allocation2 + $0x38] sm:$0xff]
  %v462 = vld [vmem:[#allocation2 + $0x40] sm:$0xff]
  %v463 = vld [vmem:[#allocation2 + $0x48] sm:$0xff]
  %v464 = vld [vmem:[#allocation2 + $0x50] sm:$0xff]
  %v465 = vld [vmem:[#allocation2 + $0x58] sm:$0xff]
  %v466 = vmax.f32 %v454, 0.0
  %v467 = vmax.f32 %v455, 0.0
  %v468 = vmax.f32 %v456, 0.0
  %v469 = vmax.f32 %v457, 0.0
  %v470 = vmax.f32 %v458, 0.0
  %v471 = vmax.f32 %v459, 0.0
  %v472 = vmax.f32 %v460, 0.0
  %v473 = vmax.f32 %v461, 0.0
  %v474 = vmax.f32 %v462, 0.0
  %v475 = vmax.f32 %v463, 0.0
  %v476 = vmax.f32 %v464, 0.0
  %v477 = vmax.f32 %v465, 0.0
  %478 = vst.msk [vmem:[#allocation2] sm:$0xff] %vm259, %v466
  %479 = vst.msk [vmem:[#allocation2 + $0x8] sm:$0xff] %vm259, %v467
  %480 = vst.msk [vmem:[#allocation2 + $0x10] sm:$0xff] %vm259, %v468
  %481 = vst.msk [vmem:[#allocation2 + $0x18] sm:$0xff] %vm259, %v469
  %482 = vst.msk [vmem:[#allocation2 + $0x20] sm:$0xff] %vm259, %v470
  %483 = vst.msk [vmem:[#allocation2 + $0x28] sm:$0xff] %vm259, %v471
  %484 = vst.msk [vmem:[#allocation2 + $0x30] sm:$0xff] %vm259, %v472
  %485 = vst.msk [vmem:[#allocation2 + $0x38] sm:$0xff] %vm259, %v473
  %486 = vst.msk [vmem:[#allocation2 + $0x40] sm:$0xff] %vm259, %v474
  %487 = vst.msk [vmem:[#allocation2 + $0x48] sm:$0xff] %vm259, %v475
  %488 = vst.msk [vmem:[#allocation2 + $0x50] sm:$0xff] %vm259, %v476
  %489 = vst.msk [vmem:[#allocation2 + $0x58] sm:$0xff] %vm259, %v477
  %v490 = vld [vmem:[#allocation2] sm:$0xff]
  %v491 = vld [vmem:[#allocation2 + $0x8] sm:$0xff]
  %v492 = vld [vmem:[#allocation2 + $0x10] sm:$0xff]
  %v493 = vld [vmem:[#allocation2 + $0x18] sm:$0xff]
  %v494 = vld [vmem:[#allocation2 + $0x20] sm:$0xff]
  %v495 = vld [vmem:[#allocation2 + $0x28] sm:$0xff]
  %v496 = vld [vmem:[#allocation2 + $0x30] sm:$0xff]
  %v497 = vld [vmem:[#allocation2 + $0x38] sm:$0xff]
  %v498 = vld [vmem:[#allocation2 + $0x40] sm:$0xff]
  %v499 = vld [vmem:[#allocation2 + $0x48] sm:$0xff]
  %v500 = vld [vmem:[#allocation2 + $0x50] sm:$0xff]
  %v501 = vld [vmem:[#allocation2 + $0x58] sm:$0xff]
  %s502 = scalar_lea.vmem %s2, 32
  %v503 = vld [vmem:[%s502] sm:$0xff]
  %v504 = vld [vmem:[%s502 + $0x8] sm:$0xff]
  %v505 = vld [vmem:[%s502 + $0x10] sm:$0xff]
  %v506 = vld [vmem:[%s502 + $0x18] sm:$0xff]
  %v508 = vsel %vm259, %v490, 0
  %v511 = vsel %vm259, %v491, 0
  %v514 = vsel %vm259, %v492, 0
  %v517 = vsel %vm259, %v493, 0
  %v520 = vsel %vm259, %v494, 0
  %v523 = vsel %vm259, %v495, 0
  %v526 = vsel %vm259, %v496, 0
  %v529 = vsel %vm259, %v497, 0
  %v532 = vsel %vm259, %v498, 0
  %v535 = vsel %vm259, %v499, 0
  %v538 = vsel %vm259, %v500, 0
  %v541 = vsel %vm259, %v501, 0
  %543 = vmatpush.msra.mxu0 0.0
  %544 = vmatpush.msra.mxu0 0.0
  %545 = vmatpush.msra.mxu0 0.0
  %546 = vmatpush.msra.mxu0 0.0
  %547 = vmatpush.msra.mxu0 0.0
  %548 = vmatpush.msra.mxu0 0.0
  %549 = vmatpush.msra.mxu0 0.0
  %550 = vmatpush.msra.mxu0 0.0
  %551 = vmatpush.msra.mxu0 0.0
  %552 = vmatpush.msra.mxu0 0.0
  %553 = vmatpush.msra.mxu0 0.0
  %554 = vmatpush.msra.mxu0 0.0
  %555 = vmatpush.msra.mxu0 %v506
  %556 = vmatpush.msra.mxu0 %v505
  %557 = vmatpush.msra.mxu0 %v504
  %558 = vmatpush.msra.mxu0 %v503
  %559 = vmatmul.f32.gmra.mxu0 %v508
  %v560 = vpop.f32.mrf.mxu0
  %v561 = vadd.f32 0.0, %v560
  %562 = vmatmul.f32.gmra.mxu0 %v511
  %v563 = vpop.f32.mrf.mxu0
  %v564 = vadd.f32 0.0, %v563
  %565 = vmatmul.f32.gmra.mxu0 %v514
  %v566 = vpop.f32.mrf.mxu0
  %v567 = vadd.f32 0.0, %v566
  %568 = vmatmul.f32.gmra.mxu0 %v517
  %v569 = vpop.f32.mrf.mxu0
  %v570 = vadd.f32 0.0, %v569
  %571 = vmatmul.f32.gmra.mxu0 %v520
  %v572 = vpop.f32.mrf.mxu0
  %v573 = vadd.f32 0.0, %v572
  %574 = vmatmul.f32.gmra.mxu0 %v523
  %v575 = vpop.f32.mrf.mxu0
  %v576 = vadd.f32 0.0, %v575
  %577 = vmatmul.f32.gmra.mxu0 %v526
  %v578 = vpop.f32.mrf.mxu0
  %v579 = vadd.f32 0.0, %v578
  %580 = vmatmul.f32.gmra.mxu0 %v529
  %v581 = vpop.f32.mrf.mxu0
  %v582 = vadd.f32 0.0, %v581
  %583 = vmatmul.f32.gmra.mxu0 %v532
  %v584 = vpop.f32.mrf.mxu0
  %v585 = vadd.f32 0.0, %v584
  %586 = vmatmul.f32.gmra.mxu0 %v535
  %v587 = vpop.f32.mrf.mxu0
  %v588 = vadd.f32 0.0, %v587
  %589 = vmatmul.f32.gmra.mxu0 %v538
  %v590 = vpop.f32.mrf.mxu0
  %v591 = vadd.f32 0.0, %v590
  %592 = vmatmul.f32.gmra.mxu0 %v541
  %v593 = vpop.f32.mrf.mxu0
  %v594 = vadd.f32 0.0, %v593
  %595 = vdwg.mxu0
  %v596 = vld [vmem:[%s4] sm:$0x1]
  %v598 = vperm.slane %v596, 0
  %v600 = vadd.f32 %v561, %v598
  %v601 = vadd.f32 %v564, %v598
  %v602 = vadd.f32 %v567, %v598
  %v603 = vadd.f32 %v570, %v598
  %v604 = vadd.f32 %v573, %v598
  %v605 = vadd.f32 %v576, %v598
  %v606 = vadd.f32 %v579, %v598
  %v607 = vadd.f32 %v582, %v598
  %v608 = vadd.f32 %v585, %v598
  %v609 = vadd.f32 %v588, %v598
  %v610 = vadd.f32 %v591, %v598
  %v611 = vadd.f32 %v594, %v598
  %612 = vst.msk [vmem:[#allocation3] sm:$0xff] %vm259, %v600
  %613 = vst.msk [vmem:[#allocation3 + $0x8] sm:$0xff] %vm259, %v601
  %614 = vst.msk [vmem:[#allocation3 + $0x10] sm:$0xff] %vm259, %v602
  %615 = vst.msk [vmem:[#allocation3 + $0x18] sm:$0xff] %vm259, %v603
  %616 = vst.msk [vmem:[#allocation3 + $0x20] sm:$0xff] %vm259, %v604
  %617 = vst.msk [vmem:[#allocation3 + $0x28] sm:$0xff] %vm259, %v605
  %618 = vst.msk [vmem:[#allocation3 + $0x30] sm:$0xff] %vm259, %v606
  %619 = vst.msk [vmem:[#allocation3 + $0x38] sm:$0xff] %vm259, %v607
  %620 = vst.msk [vmem:[#allocation3 + $0x40] sm:$0xff] %vm259, %v608
  %621 = vst.msk [vmem:[#allocation3 + $0x48] sm:$0xff] %vm259, %v609
  %622 = vst.msk [vmem:[#allocation3 + $0x50] sm:$0xff] %vm259, %v610
  %623 = vst.msk [vmem:[#allocation3 + $0x58] sm:$0xff] %vm259, %v611
  %s624 = scalar_lea.vmem [#allocation3], 8
  %v625 = vld [vmem:[%s624] sm:$0xff]
  %v626 = vld [vmem:[%s624 + $0x8] sm:$0xff]
  %v627 = vld [vmem:[%s624 + $0x10] sm:$0xff]
  %v628 = vld [vmem:[%s624 + $0x18] sm:$0xff]
  %v629 = vld [vmem:[%s624 + $0x20] sm:$0xff]
  %v630 = vld [vmem:[%s624 + $0x28] sm:$0xff]
  %v631 = vld [vmem:[%s624 + $0x30] sm:$0xff]
  %v632 = vld [vmem:[%s624 + $0x38] sm:$0xff]
  %v633 = vld [vmem:[%s624 + $0x40] sm:$0xff]
  %v634 = vld [vmem:[%s624 + $0x48] sm:$0xff]
  %v635 = vld [vmem:[%s624 + $0x50] sm:$0xff]
  %v636 = vld [vmem:[#allocation2] sm:$0xff]
  %v637 = vld [vmem:[#allocation2 + $0x8] sm:$0xff]
  %v638 = vld [vmem:[#allocation2 + $0x10] sm:$0xff]
  %v639 = vld [vmem:[#allocation2 + $0x18] sm:$0xff]
  %v640 = vld [vmem:[#allocation2 + $0x20] sm:$0xff]
  %v641 = vld [vmem:[#allocation2 + $0x28] sm:$0xff]
  %v642 = vld [vmem:[#allocation2 + $0x30] sm:$0xff]
  %v643 = vld [vmem:[#allocation2 + $0x38] sm:$0xff]
  %v644 = vld [vmem:[#allocation2 + $0x40] sm:$0xff]
  %v645 = vld [vmem:[#allocation2 + $0x48] sm:$0xff]
  %v646 = vld [vmem:[#allocation2 + $0x50] sm:$0xff]
  %v647 = vld [vmem:[%s2] sm:$0xff]
  %v648 = vld [vmem:[%s2 + $0x8] sm:$0xff]
  %v649 = vld [vmem:[%s2 + $0x10] sm:$0xff]
  %v650 = vld [vmem:[%s2 + $0x18] sm:$0xff]
  %v652 = vsel %vm259, %v636, 0
  %v655 = vsel %vm259, %v637, 0
  %v658 = vsel %vm259, %v638, 0
  %v661 = vsel %vm259, %v639, 0
  %v664 = vsel %vm259, %v640, 0
  %v667 = vsel %vm259, %v641, 0
  %v670 = vsel %vm259, %v642, 0
  %v673 = vsel %vm259, %v643, 0
  %v676 = vsel %vm259, %v644, 0
  %v679 = vsel %vm259, %v645, 0
  %v682 = vsel %vm259, %v646, 0
  %684 = vmatpush.msra.mxu0 0.0
  %685 = vmatpush.msra.mxu0 0.0
  %686 = vmatpush.msra.mxu0 0.0
  %687 = vmatpush.msra.mxu0 0.0
  %688 = vmatpush.msra.mxu0 0.0
  %689 = vmatpush.msra.mxu0 0.0
  %690 = vmatpush.msra.mxu0 0.0
  %691 = vmatpush.msra.mxu0 0.0
  %692 = vmatpush.msra.mxu0 0.0
  %693 = vmatpush.msra.mxu0 0.0
  %694 = vmatpush.msra.mxu0 0.0
  %695 = vmatpush.msra.mxu0 0.0
  %696 = vmatpush.msra.mxu0 %v650
  %697 = vmatpush.msra.mxu0 %v649
  %698 = vmatpush.msra.mxu0 %v648
  %699 = vmatpush.msra.mxu0 %v647
  %700 = vmatmul.f32.gmra.mxu0 %v652
  %v701 = vpop.f32.mrf.mxu0
  %v702 = vadd.f32 0.0, %v701
  %703 = vmatmul.f32.gmra.mxu0 %v655
  %v704 = vpop.f32.mrf.mxu0
  %v705 = vadd.f32 0.0, %v704
  %706 = vmatmul.f32.gmra.mxu0 %v658
  %v707 = vpop.f32.mrf.mxu0
  %v708 = vadd.f32 0.0, %v707
  %709 = vmatmul.f32.gmra.mxu0 %v661
  %v710 = vpop.f32.mrf.mxu0
  %v711 = vadd.f32 0.0, %v710
  %712 = vmatmul.f32.gmra.mxu0 %v664
  %v713 = vpop.f32.mrf.mxu0
  %v714 = vadd.f32 0.0, %v713
  %715 = vmatmul.f32.gmra.mxu0 %v667
  %v716 = vpop.f32.mrf.mxu0
  %v717 = vadd.f32 0.0, %v716
  %718 = vmatmul.f32.gmra.mxu0 %v670
  %v719 = vpop.f32.mrf.mxu0
  %v720 = vadd.f32 0.0, %v719
  %721 = vmatmul.f32.gmra.mxu0 %v673
  %v722 = vpop.f32.mrf.mxu0
  %v723 = vadd.f32 0.0, %v722
  %724 = vmatmul.f32.gmra.mxu0 %v676
  %v725 = vpop.f32.mrf.mxu0
  %v726 = vadd.f32 0.0, %v725
  %727 = vmatmul.f32.gmra.mxu0 %v679
  %v728 = vpop.f32.mrf.mxu0
  %v729 = vadd.f32 0.0, %v728
  %730 = vmatmul.f32.gmra.mxu0 %v682
  %v731 = vpop.f32.mrf.mxu0
  %v732 = vadd.f32 0.0, %v731
  %733 = vdwg.mxu0
  %v734 = vadd.f32 %v625, %v702
  %v735 = vadd.f32 %v626, %v705
  %v736 = vadd.f32 %v627, %v708
  %v737 = vadd.f32 %v628, %v711
  %v738 = vadd.f32 %v629, %v714
  %v739 = vadd.f32 %v630, %v717
  %v740 = vadd.f32 %v631, %v720
  %v741 = vadd.f32 %v632, %v723
  %v742 = vadd.f32 %v633, %v726
  %v743 = vadd.f32 %v634, %v729
  %v744 = vadd.f32 %v635, %v732
  %745 = vst.msk [vmem:[%s624] sm:$0xff] %vm259, %v734
  %746 = vst.msk [vmem:[%s624 + $0x8] sm:$0xff] %vm259, %v735
  %747 = vst.msk [vmem:[%s624 + $0x10] sm:$0xff] %vm259, %v736
  %748 = vst.msk [vmem:[%s624 + $0x18] sm:$0xff] %vm259, %v737
  %749 = vst.msk [vmem:[%s624 + $0x20] sm:$0xff] %vm259, %v738
  %750 = vst.msk [vmem:[%s624 + $0x28] sm:$0xff] %vm259, %v739
  %751 = vst.msk [vmem:[%s624 + $0x30] sm:$0xff] %vm259, %v740
  %752 = vst.msk [vmem:[%s624 + $0x38] sm:$0xff] %vm259, %v741
  %753 = vst.msk [vmem:[%s624 + $0x40] sm:$0xff] %vm259, %v742
  %754 = vst.msk [vmem:[%s624 + $0x48] sm:$0xff] %vm259, %v743
  %755 = vst.msk [vmem:[%s624 + $0x50] sm:$0xff] %vm259, %v744
  %v756 = vld [vmem:[#allocation3] sm:$0xff]
  %v757 = vld [vmem:[#allocation3 + $0x8] sm:$0xff]
  %v758 = vld [vmem:[#allocation3 + $0x10] sm:$0xff]
  %v759 = vld [vmem:[#allocation3 + $0x18] sm:$0xff]
  %v760 = vld [vmem:[#allocation3 + $0x20] sm:$0xff]
  %v761 = vld [vmem:[#allocation3 + $0x28] sm:$0xff]
  %v762 = vld [vmem:[#allocation3 + $0x30] sm:$0xff]
  %v763 = vld [vmem:[#allocation3 + $0x38] sm:$0xff]
  %v764 = vld [vmem:[#allocation3 + $0x40] sm:$0xff]
  %v765 = vld [vmem:[#allocation3 + $0x48] sm:$0xff]
  %v766 = vld [vmem:[#allocation3 + $0x50] sm:$0xff]
  %v767 = vld [vmem:[%s272] sm:$0xff]
  %v768 = vld [vmem:[%s272 + $0x8] sm:$0xff]
  %v769 = vld [vmem:[%s272 + $0x10] sm:$0xff]
  %v770 = vld [vmem:[%s272 + $0x18] sm:$0xff]
  %v771 = vld [vmem:[%s272 + $0x20] sm:$0xff]
  %v772 = vld [vmem:[%s272 + $0x28] sm:$0xff]
  %v773 = vld [vmem:[%s272 + $0x30] sm:$0xff]
  %v774 = vld [vmem:[%s272 + $0x38] sm:$0xff]
  %v775 = vld [vmem:[%s272 + $0x40] sm:$0xff]
  %v776 = vld [vmem:[%s272 + $0x48] sm:$0xff]
  %v777 = vld [vmem:[%s272 + $0x50] sm:$0xff]
  %s778 = scalar_lea.vmem %s2, 64
  %v779 = vld [vmem:[%s778] sm:$0xff]
  %v780 = vld [vmem:[%s778 + $0x8] sm:$0xff]
  %v781 = vld [vmem:[%s778 + $0x10] sm:$0xff]
  %v782 = vld [vmem:[%s778 + $0x18] sm:$0xff]
  %v784 = vsel %vm259, %v767, 0
  %v787 = vsel %vm259, %v768, 0
  %v790 = vsel %vm259, %v769, 0
  %v793 = vsel %vm259, %v770, 0
  %v796 = vsel %vm259, %v771, 0
  %v799 = vsel %vm259, %v772, 0
  %v802 = vsel %vm259, %v773, 0
  %v805 = vsel %vm259, %v774, 0
  %v808 = vsel %vm259, %v775, 0
  %v811 = vsel %vm259, %v776, 0
  %v814 = vsel %vm259, %v777, 0
  %816 = vmatpush.msra.mxu0 0.0
  %817 = vmatpush.msra.mxu0 0.0
  %818 = vmatpush.msra.mxu0 0.0
  %819 = vmatpush.msra.mxu0 0.0
  %820 = vmatpush.msra.mxu0 0.0
  %821 = vmatpush.msra.mxu0 0.0
  %822 = vmatpush.msra.mxu0 0.0
  %823 = vmatpush.msra.mxu0 0.0
  %824 = vmatpush.msra.mxu0 0.0
  %825 = vmatpush.msra.mxu0 0.0
  %826 = vmatpush.msra.mxu0 0.0
  %827 = vmatpush.msra.mxu0 0.0
  %828 = vmatpush.msra.mxu0 %v782
  %829 = vmatpush.msra.mxu0 %v781
  %830 = vmatpush.msra.mxu0 %v780
  %831 = vmatpush.msra.mxu0 %v779
  %832 = vmatmul.f32.gmra.mxu0 %v784
  %v833 = vpop.f32.mrf.mxu0
  %v834 = vadd.f32 0.0, %v833
  %835 = vmatmul.f32.gmra.mxu0 %v787
  %v836 = vpop.f32.mrf.mxu0
  %v837 = vadd.f32 0.0, %v836
  %838 = vmatmul.f32.gmra.mxu0 %v790
  %v839 = vpop.f32.mrf.mxu0
  %v840 = vadd.f32 0.0, %v839
  %841 = vmatmul.f32.gmra.mxu0 %v793
  %v842 = vpop.f32.mrf.mxu0
  %v843 = vadd.f32 0.0, %v842
  %844 = vmatmul.f32.gmra.mxu0 %v796
  %v845 = vpop.f32.mrf.mxu0
  %v846 = vadd.f32 0.0, %v845
  %847 = vmatmul.f32.gmra.mxu0 %v799
  %v848 = vpop.f32.mrf.mxu0
  %v849 = vadd.f32 0.0, %v848
  %850 = vmatmul.f32.gmra.mxu0 %v802
  %v851 = vpop.f32.mrf.mxu0
  %v852 = vadd.f32 0.0, %v851
  %853 = vmatmul.f32.gmra.mxu0 %v805
  %v854 = vpop.f32.mrf.mxu0
  %v855 = vadd.f32 0.0, %v854
  %856 = vmatmul.f32.gmra.mxu0 %v808
  %v857 = vpop.f32.mrf.mxu0
  %v858 = vadd.f32 0.0, %v857
  %859 = vmatmul.f32.gmra.mxu0 %v811
  %v860 = vpop.f32.mrf.mxu0
  %v861 = vadd.f32 0.0, %v860
  %862 = vmatmul.f32.gmra.mxu0 %v814
  %v863 = vpop.f32.mrf.mxu0
  %v864 = vadd.f32 0.0, %v863
  %865 = vdwg.mxu0
  %v866 = vadd.f32 %v756, %v834
  %v867 = vadd.f32 %v757, %v837
  %v868 = vadd.f32 %v758, %v840
  %v869 = vadd.f32 %v759, %v843
  %v870 = vadd.f32 %v760, %v846
  %v871 = vadd.f32 %v761, %v849
  %v872 = vadd.f32 %v762, %v852
  %v873 = vadd.f32 %v763, %v855
  %v874 = vadd.f32 %v764, %v858
  %v875 = vadd.f32 %v765, %v861
  %v876 = vadd.f32 %v766, %v864
  %877 = vst.msk [vmem:[#allocation3] sm:$0xff] %vm259, %v866
  %878 = vst.msk [vmem:[#allocation3 + $0x8] sm:$0xff] %vm259, %v867
  %879 = vst.msk [vmem:[#allocation3 + $0x10] sm:$0xff] %vm259, %v868
  %880 = vst.msk [vmem:[#allocation3 + $0x18] sm:$0xff] %vm259, %v869
  %881 = vst.msk [vmem:[#allocation3 + $0x20] sm:$0xff] %vm259, %v870
  %882 = vst.msk [vmem:[#allocation3 + $0x28] sm:$0xff] %vm259, %v871
  %883 = vst.msk [vmem:[#allocation3 + $0x30] sm:$0xff] %vm259, %v872
  %884 = vst.msk [vmem:[#allocation3 + $0x38] sm:$0xff] %vm259, %v873
  %885 = vst.msk [vmem:[#allocation3 + $0x40] sm:$0xff] %vm259, %v874
  %886 = vst.msk [vmem:[#allocation3 + $0x48] sm:$0xff] %vm259, %v875
  %887 = vst.msk [vmem:[#allocation3 + $0x50] sm:$0xff] %vm259, %v876
  %v888 = vld [vmem:[#allocation3] sm:$0xff]
  %v889 = vld [vmem:[#allocation3 + $0x8] sm:$0xff]
  %v890 = vld [vmem:[#allocation3 + $0x10] sm:$0xff]
  %v891 = vld [vmem:[#allocation3 + $0x18] sm:$0xff]
  %v892 = vld [vmem:[#allocation3 + $0x20] sm:$0xff]
  %v893 = vld [vmem:[#allocation3 + $0x28] sm:$0xff]
  %v894 = vld [vmem:[#allocation3 + $0x30] sm:$0xff]
  %v895 = vld [vmem:[#allocation3 + $0x38] sm:$0xff]
  %v896 = vld [vmem:[#allocation3 + $0x40] sm:$0xff]
  %v897 = vld [vmem:[#allocation3 + $0x48] sm:$0xff]
  %v898 = vld [vmem:[#allocation3 + $0x50] sm:$0xff]
  %v899 = vld [vmem:[#allocation3 + $0x58] sm:$0xff]
  %v900 = vmax.f32 %v888, 0.0
  %v901 = vmax.f32 %v889, 0.0
  %v902 = vmax.f32 %v890, 0.0
  %v903 = vmax.f32 %v891, 0.0
  %v904 = vmax.f32 %v892, 0.0
  %v905 = vmax.f32 %v893, 0.0
  %v906 = vmax.f32 %v894, 0.0
  %v907 = vmax.f32 %v895, 0.0
  %v908 = vmax.f32 %v896, 0.0
  %v909 = vmax.f32 %v897, 0.0
  %v910 = vmax.f32 %v898, 0.0
  %v911 = vmax.f32 %v899, 0.0
  %v912 = vsel %vm259, %v900, -inf
  %v913 = vsel %vm259, %v901, -inf
  %v914 = vsel %vm259, %v902, -inf
  %v915 = vsel %vm259, %v903, -inf
  %v916 = vsel %vm259, %v904, -inf
  %v917 = vmax.f32 %v912, %v916
  %v918 = vsel %vm259, %v905, -inf
  %v919 = vmax.f32 %v913, %v918
  %v920 = vsel %vm259, %v906, -inf
  %v921 = vmax.f32 %v914, %v920
  %v922 = vsel %vm259, %v907, -inf
  %v923 = vmax.f32 %v915, %v922
  %v924 = vsel %vm259, %v908, -inf
  %v925 = vmax.f32 %v917, %v924
  %v926 = vsel %vm259, %v909, -inf
  %v927 = vmax.f32 %v919, %v926
  %v928 = vsel %vm259, %v910, -inf
  %v929 = vmax.f32 %v921, %v928
  %v930 = vsel %vm259, %v911, -inf
  %v931 = vmax.f32 %v923, %v930
  %v932 = vmax.f32 %v925, %v927
  %v933 = vmax.f32 %v929, %v931
  %v934 = vmax.f32 %v932, %v933
  %935 = vst.msk [vmem:[%s5] sm:$0xff] %vm259, %v934
  // Predicated region
  $region22: #{character_conv_forward.1} parent=0 // pred_check
    _
  $region23: #{character_conv_forward.1} parent=0 // pred_check_branch
    %937 = sbr.rel (0) target = $region25
  $region24: #{character_conv_forward.1} parent=0 // pred_region
    _
  $region25: #{character_conv_forward.1} parent=0 // pred_fallthru
    _
  // Predicated region
  $region26: #{character_conv_forward.1} parent=0 // pred_check
    _
  $region27: #{character_conv_forward.1} parent=0 // pred_check_branch
    %939 = sbr.rel (0) target = $region29
  $region28: #{character_conv_forward.1} parent=0 // pred_region
    _
  $region29: #{character_conv_forward.1} parent=0 // pred_fallthru
    _

</llo_original>
